<compile_context>
chip_gen: v7x
topology: tpu7x:2x2x1
jax: 0.10.0
libtpu: 0.0.40
codegen_flags: <defaults>
</compile_context>

<pallas_src>
import functools

import jax
import jax.numpy as jnp
from jax.experimental import pallas as pl
from jax.experimental.pallas import tpu as pltpu

LOG_SIG_MIN = -20.0
LOG_SIG_MAX = 2.0


def _round_up(x, m):
    return (x + m - 1) // m * m


# -----------------------------------------------------------------------------
# Kernel
# -----------------------------------------------------------------------------
def actor_kernel(x_ref, wp_ref, bp_ref, out_ref, *,
                 d_in, d_pad, l1, l2, la, compute_dtype):
    # In-kernel cast: state arrives as f32 (half the HBM bytes of a wrapper
    # cast round-trip); the convert rides in a free VPU slot.
    x = x_ref[...].astype(compute_dtype)                    # [TB, d_in]

    # Static, tile-aligned views into the packed parameter slabs.
    # Row offsets d_pad and d_pad+l1 are multiples of 16 (bf16 sublane tile);
    # all lane offsets/widths are multiples of 128.
    w1 = wp_ref[0:d_in, 0:l1]                               # [d_in, l1]
    w2 = wp_ref[d_pad:d_pad + l1, 0:l2]                     # [l1,   l2]
    wh = wp_ref[d_pad + l1:d_pad + l1 + l2, 0:2 * la]       # [l2,   2*la] (mu||log_sigma)
    b1 = bp_ref[0:1, 0:l1]                                  # [1, l1]   f32
    b2 = bp_ref[1:2, 0:l2]                                  # [1, l2]   f32
    bh = bp_ref[2:3, 0:2 * la]                              # [1, 2*la] f32

    # fc1 + relu (MXU in compute_dtype, f32 accumulate, f32 epilogue).
    h1 = jnp.dot(x, w1, preferred_element_type=jnp.float32) + b1
    h1 = jnp.maximum(h1, 0.0).astype(compute_dtype)         # [TB, l1], padded lanes == 0

    # fc2 + relu.
    h2 = jnp.dot(h1, w2, preferred_element_type=jnp.float32) + b2
    h2 = jnp.maximum(h2, 0.0).astype(compute_dtype)         # [TB, l2], padded lanes == 0

    # Fused head: lanes [0, la) -> mu, [la, 2*la) -> log_sigma.
    head = jnp.dot(h2, wh, preferred_element_type=jnp.float32) + bh   # [TB, 2*la] f32

    mu = head[:, 0:la]                                      # 128-aligned slice
    ls = head[:, la:2 * la]                                 # 128-aligned slice
    std = jnp.exp(jnp.clip(ls, LOG_SIG_MIN, LOG_SIG_MAX))   # exp only on log_sigma half

    # Two unmasked, 128-lane-aligned full-width stores.
    out_ref[:, 0:la] = mu
    out_ref[:, la:2 * la] = std


# -----------------------------------------------------------------------------
# One-time parameter packing (call at init / after each optimizer step,
# NOT per forward).
# -----------------------------------------------------------------------------
def pack_params(params, compute_dtype=jnp.bfloat16):
    w1, b1 = params["w1"], params["b1"]
    w2, b2 = params["w2"], params["b2"]
    wmu, bmu = params["wmu"], params["bmu"]
    wls, bls = params["wls"], params["bls"]

    d_in, fc1 = w1.shape
    fc2 = w2.shape[1]
    n_act = wmu.shape[1]

    sub = 16 if compute_dtype == jnp.bfloat16 else 8
    d_pad = _round_up(d_in, sub)          # row-aligned start for w2 segment
    l1 = _round_up(fc1, 128)              # lane-dense hidden widths
    l2 = _round_up(fc2, 128)
    la = _round_up(n_act, 128)
    lane_w = max(l1, l2, 2 * la)

    def seg(w, rows, cols):
        return jnp.pad(w, ((0, rows - w.shape[0]), (0, cols - w.shape[1])))

    w1_seg = seg(w1, d_pad, lane_w)                                   # [d_pad, lane_w]
    w2_seg = seg(w2, l1, lane_w)                                      # [l1,   lane_w]
    wh = jnp.concatenate([seg(wmu, fc2, la), seg(wls, fc2, la)], axis=1)
    wh_seg = seg(wh, l2, lane_w)                                      # [l2,   lane_w]
    wp = jnp.concatenate([w1_seg, w2_seg, wh_seg], axis=0).astype(compute_dtype)

    # Biases: one segment per sublane row, each starting at lane 0.
    b1_row = jnp.pad(b1.reshape(1, -1), ((0, 0), (0, lane_w - fc1)))
    b2_row = jnp.pad(b2.reshape(1, -1), ((0, 0), (0, lane_w - fc2)))
    bh_row = jnp.concatenate(
        [jnp.pad(bmu.reshape(1, -1), ((0, 0), (0, la - n_act))),
         jnp.pad(bls.reshape(1, -1), ((0, 0), (0, la - n_act)))], axis=1)
    bh_row = jnp.pad(bh_row, ((0, 0), (0, lane_w - 2 * la)))
    bp = jnp.concatenate([b1_row, b2_row, bh_row], axis=0)
    bp = jnp.pad(bp, ((0, 8 - bp.shape[0]), (0, 0))).astype(jnp.float32)  # [8, lane_w]

    dims = dict(d_in=d_in, d_pad=d_pad, fc1=fc1, fc2=fc2, n_act=n_act,
                l1=l1, l2=l2, la=la, lane_w=lane_w)
    return dict(wp=wp, bp=bp, dims=dims, compute_dtype=compute_dtype)


def _choose_tb(B, batch_tile=1024):
    # Small batches: one grid step (minimal overhead).
    if B <= 256:
        return B
    # Large batches: >= 2 steps so v7x's two TensorCores both get work,
    # tb a multiple of 16 (bf16 sublane), capped at batch_tile.
    return min(batch_tile, _round_up(pl.cdiv(B, 2), 16))


# -----------------------------------------------------------------------------
# Forward
# -----------------------------------------------------------------------------
def actor_forward(state, packed, *, batch_tile=1024):
    """state: [B, d_in] f32.  packed: output of pack_params().
    Returns (mu, std), each [B, n_actions] f32."""
    B, d_in = state.shape
    d = packed["dims"]
    assert d_in == d["d_in"]
    wp, bp = packed["wp"], packed["bp"]
    la, n_act = d["la"], d["n_act"]
    compute_dtype = packed["compute_dtype"]

    tb = _choose_tb(B, batch_tile)
    grid = (pl.cdiv(B, tb),)

    kernel = functools.partial(
        actor_kernel, d_in=d["d_in"], d_pad=d["d_pad"],
        l1=d["l1"], l2=d["l2"], la=la, compute_dtype=compute_dtype)

    flops = 2 * B * (d["d_in"] * d["fc1"] + d["fc1"] * d["fc2"]
                     + d["fc2"] * 2 * n_act)
    bytes_accessed = (state.size * 4 + wp.size * wp.dtype.itemsize
                      + bp.size * 4 + B * 2 * la * 4)
    cost = pl.CostEstimate(flops=flops, transcendentals=B * n_act,
                           bytes_accessed=bytes_accessed)

    out = pl.pallas_call(
        kernel,
        out_shape=jax.ShapeDtypeStruct((B, 2 * la), jnp.float32),
        grid=grid,
        in_specs=[
            pl.BlockSpec((tb, d_in), lambda i: (i, 0)),     # f32 state rows (pipelined)
            pl.BlockSpec(wp.shape, lambda i: (0, 0)),       # packed weights (resident)
            pl.BlockSpec(bp.shape, lambda i: (0, 0)),       # packed biases  (resident)
        ],
        out_specs=pl.BlockSpec((tb, 2 * la), lambda i: (i, 0)),
        compiler_params=pltpu.CompilerParams(
            dimension_semantics=("parallel",)),
        cost_estimate=cost,
    )(state, wp, bp)

    mu = out[:, :n_act]
    std = out[:, la:la + n_act]
    return mu, std


# -----------------------------------------------------------------------------
# Init + references
# -----------------------------------------------------------------------------
def init_params(key, input_dims, fc1_dims, fc2_dims, n_actions):
    """Deterministic init mimicking nn.Linear default (U[-1/sqrt(fan_in), +])."""
    def linear(k, fan_in, fan_out):
        kw, kb = jax.random.split(k)
        bound = 1.0 / jnp.sqrt(fan_in)
        w = jax.random.uniform(kw, (fan_in, fan_out), jnp.float32, -bound, bound)
        b = jax.random.uniform(kb, (1, fan_out), jnp.float32, -bound, bound)
        return w, b

    k1, k2, k3, k4 = jax.random.split(key, 4)
    w1, b1 = linear(k1, input_dims, fc1_dims)
    w2, b2 = linear(k2, fc1_dims, fc2_dims)
    wmu, bmu = linear(k3, fc2_dims, n_actions)
    wls, bls = linear(k4, fc2_dims, n_actions)
    return dict(w1=w1, b1=b1, w2=w2, b2=b2,
                wmu=wmu, bmu=bmu, wls=wls, bls=bls)


def actor_forward_ref(state, p, compute_dtype=jnp.bfloat16):
    """Pure-JAX reference in the SAME mixed precision as the kernel."""
    def mm(a, w):
        return jnp.dot(a.astype(compute_dtype), w.astype(compute_dtype),
                       preferred_element_type=jnp.float32)
    h1 = jnp.maximum(mm(state, p["w1"]) + p["b1"], 0.0)
    h2 = jnp.maximum(mm(h1, p["w2"]) + p["b2"], 0.0)
    mu = mm(h2, p["wmu"]) + p["bmu"]
    ls = jnp.clip(mm(h2, p["wls"]) + p["bls"], LOG_SIG_MIN, LOG_SIG_MAX)
    return mu, jnp.exp(ls)


def actor_forward_ref_f32(state, p):
    """Full-f32 reference (PyTorch semantics) for a looser sanity check."""
    h1 = jnp.maximum(state @ p["w1"] + p["b1"], 0.0)
    h2 = jnp.maximum(h1 @ p["w2"] + p["b2"], 0.0)
    mu = h2 @ p["wmu"] + p["bmu"]
    ls = jnp.clip(h2 @ p["wls"] + p["bls"], LOG_SIG_MIN, LOG_SIG_MAX)
    return mu, jnp.exp(ls)


if __name__ == "__main__":
    # Small shapes consistent with the module: input_dims=16, fc1=32, fc2=32,
    # n_actions=8, batch=8.
    B, D_IN, FC1, FC2, N_ACT = 8, 16, 32, 32, 8

    key = jax.random.PRNGKey(0)
    k_params, k_state = jax.random.split(key)

    params = init_params(k_params, D_IN, FC1, FC2, N_ACT)
    state = jax.random.normal(k_state, (B, D_IN), jnp.float32)

    # Pack once (init / param-update time), reuse across forwards.
    packed = pack_params(params)
    jax.block_until_ready((packed["wp"], packed["bp"]))

    mu, std = actor_forward(state, packed)
    jax.block_until_ready((mu, std))

    # Matched-precision check (tight).
    mu_ref, std_ref = actor_forward_ref(state, params)
    assert jnp.allclose(mu, mu_ref, atol=1e-3, rtol=1e-3), "mu mismatch vs mixed-precision ref"
    assert jnp.allclose(std, std_ref, atol=1e-3, rtol=1e-3), "std mismatch vs mixed-precision ref"

    # Full-f32 semantics check (loose, accounts for bf16 matmul operands).
    mu32, std32 = actor_forward_ref_f32(state, params)
    assert jnp.allclose(mu, mu32, atol=3e-2, rtol=3e-2), "mu drift vs f32 ref too large"
    assert jnp.allclose(std, std32, atol=3e-2, rtol=3e-2), "std drift vs f32 ref too large"
    assert jnp.all(std > 0)

    # TODO(synk): TanhNormal distribution object (rsample / log_prob) is host-side
    # sampling logic, not kernel compute; the kernel returns its parameters (mu, std).
    print("KERNEL_OK")
</pallas_src>

<mosaic_0001>
module attributes {stable_mosaic.version = 11 : i64} {
  func.func @actor_kernel(%arg0: i32, %arg1: memref<8x16xf32, #tpu.memory_space<vmem>>, %arg2: memref<272x256xbf16, #tpu.memory_space<vmem>>, %arg3: memref<8x256xf32, #tpu.memory_space<vmem>>, %arg4: memref<8x256xf32, #tpu.memory_space<vmem>>) attributes {dimension_semantics = [#tpu.dimension_semantics<parallel>], iteration_bounds = array<i64: 1>, scalar_prefetch = 0 : i64, scratch_operands = 0 : i64, tpu.core_type = #tpu.core_type<tc>, window_params = [{transform_indices = @transform_0, window_bounds = array<i64: 8, 16>}, {pipeline_mode = #tpu.pipeline_mode<synchronous>, transform_indices = @transform_1, window_bounds = array<i64: 272, 256>}, {pipeline_mode = #tpu.pipeline_mode<synchronous>, transform_indices = @transform_2, window_bounds = array<i64: 8, 256>}, {transform_indices = @transform_3, window_bounds = array<i64: 8, 256>}]} {
    %c0 = arith.constant 0 : index
    %c0_0 = arith.constant 0 : index
    %0 = vector.load %arg1[%c0, %c0_0] : memref<8x16xf32, #tpu.memory_space<vmem>>, vector<8x16xf32>
    %1 = arith.truncf %0 : vector<8x16xf32> to vector<8x16xbf16>
    %c0_1 = arith.constant 0 : index
    %c0_2 = arith.constant 0 : index
    %2 = vector.load %arg2[%c0_1, %c0_2] : memref<272x256xbf16, #tpu.memory_space<vmem>>, vector<16x128xbf16>
    %c16 = arith.constant 16 : index
    %c0_3 = arith.constant 0 : index
    %3 = vector.load %arg2[%c16, %c0_3] : memref<272x256xbf16, #tpu.memory_space<vmem>>, vector<128x128xbf16>
    %c144 = arith.constant 144 : index
    %c0_4 = arith.constant 0 : index
    %4 = vector.load %arg2[%c144, %c0_4] : memref<272x256xbf16, #tpu.memory_space<vmem>>, vector<128x256xbf16>
    %c0_5 = arith.constant 0 : index
    %c0_6 = arith.constant 0 : index
    %5 = vector.load %arg3[%c0_5, %c0_6] : memref<8x256xf32, #tpu.memory_space<vmem>>, vector<1x128xf32>
    %c1 = arith.constant 1 : index
    %c0_7 = arith.constant 0 : index
    %6 = vector.load %arg3[%c1, %c0_7] : memref<8x256xf32, #tpu.memory_space<vmem>>, vector<1x128xf32>
    %c2 = arith.constant 2 : index
    %c0_8 = arith.constant 0 : index
    %7 = vector.load %arg3[%c2, %c0_8] : memref<8x256xf32, #tpu.memory_space<vmem>>, vector<1x256xf32>
    %cst = arith.constant dense<0.000000e+00> : vector<8x128xf32>
    %8 = tpu.matmul %1, %2, %cst {dimension_numbers = #tpu.dot_dimension_numbers<[1], [0], [0], [1], [0, 0, 1, 1], [], []>} : vector<8x16xbf16>, vector<16x128xbf16>, vector<8x128xf32> -> vector<8x128xf32>
    %9 = vector.broadcast %5 : vector<1x128xf32> to vector<8x128xf32>
    %10 = arith.addf %8, %9 : vector<8x128xf32>
    %cst_9 = arith.constant 0.000000e+00 : f32
    %11 = vector.broadcast %cst_9 : f32 to vector<8x128xf32>
    %12 = arith.maximumf %10, %11 : vector<8x128xf32>
    %13 = arith.truncf %12 : vector<8x128xf32> to vector<8x128xbf16>
    %cst_10 = arith.constant dense<0.000000e+00> : vector<8x128xf32>
    %14 = tpu.matmul %13, %3, %cst_10 {dimension_numbers = #tpu.dot_dimension_numbers<[1], [0], [0], [1], [0, 0, 1, 1], [], []>} : vector<8x128xbf16>, vector<128x128xbf16>, vector<8x128xf32> -> vector<8x128xf32>
    %15 = vector.broadcast %6 : vector<1x128xf32> to vector<8x128xf32>
    %16 = arith.addf %14, %15 : vector<8x128xf32>
    %cst_11 = arith.constant 0.000000e+00 : f32
    %17 = vector.broadcast %cst_11 : f32 to vector<8x128xf32>
    %18 = arith.maximumf %16, %17 : vector<8x128xf32>
    %19 = arith.truncf %18 : vector<8x128xf32> to vector<8x128xbf16>
    %cst_12 = arith.constant dense<0.000000e+00> : vector<8x256xf32>
    %20 = tpu.matmul %19, %4, %cst_12 {dimension_numbers = #tpu.dot_dimension_numbers<[1], [0], [0], [1], [0, 0, 1, 1], [], []>} : vector<8x128xbf16>, vector<128x256xbf16>, vector<8x256xf32> -> vector<8x256xf32>
    %21 = vector.broadcast %7 : vector<1x256xf32> to vector<8x256xf32>
    %22 = arith.addf %20, %21 : vector<8x256xf32>
    %23 = vector.extract_strided_slice %22 {offsets = [0, 0], sizes = [8, 128], strides = [1, 1]} : vector<8x256xf32> to vector<8x128xf32>
    %24 = vector.extract_strided_slice %22 {offsets = [0, 128], sizes = [8, 128], strides = [1, 1]} : vector<8x256xf32> to vector<8x128xf32>
    %cst_13 = arith.constant -2.000000e+01 : f32
    %cst_14 = arith.constant 2.000000e+00 : f32
    %25 = vector.broadcast %cst_13 : f32 to vector<8x128xf32>
    %26 = arith.maximumf %25, %24 : vector<8x128xf32>
    %27 = vector.broadcast %cst_14 : f32 to vector<8x128xf32>
    %28 = arith.minimumf %27, %26 : vector<8x128xf32>
    %29 = math.exp %28 : vector<8x128xf32>
    %c0_15 = arith.constant 0 : index
    %c0_16 = arith.constant 0 : index
    %30 = vector.load %arg4[%c0_15, %c0_16] : memref<8x256xf32, #tpu.memory_space<vmem>>, vector<8x128xf32>
    tpu.vector_store %arg4[%c0_15, %c0_16], %23 {strides = array<i32>} : memref<8x256xf32, #tpu.memory_space<vmem>>, vector<8x128xf32>,
    %c0_17 = arith.constant 0 : index
    %c128 = arith.constant 128 : index
    %31 = vector.load %arg4[%c0_17, %c128] : memref<8x256xf32, #tpu.memory_space<vmem>>, vector<8x128xf32>
    tpu.vector_store %arg4[%c0_17, %c128], %29 {strides = array<i32>} : memref<8x256xf32, #tpu.memory_space<vmem>>, vector<8x128xf32>,
    return
  }
  func.func @transform_0(%arg0: i32) -> (i32, i32) {
    %c0_i32 = arith.constant 0 : i32
    %c0_i32_0 = arith.constant 0 : i32
    return %arg0, %c0_i32 : i32, i32
  }
  func.func @transform_1(%arg0: i32) -> (i32, i32) {
    %c0_i32 = arith.constant 0 : i32
    %c0_i32_0 = arith.constant 0 : i32
    %c0_i32_1 = arith.constant 0 : i32
    return %c0_i32, %c0_i32_0 : i32, i32
  }
  func.func @transform_2(%arg0: i32) -> (i32, i32) {
    %c0_i32 = arith.constant 0 : i32
    %c0_i32_0 = arith.constant 0 : i32
    %c0_i32_1 = arith.constant 0 : i32
    return %c0_i32, %c0_i32_0 : i32, i32
  }
  func.func @transform_3(%arg0: i32) -> (i32, i32) {
    %c0_i32 = arith.constant 0 : i32
    %c0_i32_0 = arith.constant 0 : i32
    return %arg0, %c0_i32 : i32, i32
  }
}

</mosaic_0001>

<llo_original>
// kernel: tpu_custom_call.1
$region0: #{tpu_custom_call.1}
  #allocation0 [shape = 'u32[]', space=smem, size = 0x4, offset = 0x4, fixed_abs, tag = 'smem constant byte address 0x4 - core index']
  #allocation1 [shape = 'u32[144,128]{1,0:T(1,128)}', space=vmem, size = 0x12000, scoped, tag = 'internal scratch']
  %s0 = inlined_call_operand.hbm [shape: f32[8,16], index: 0, kind: input, shape index: {}]
  %s1 = inlined_call_operand.hbm [shape: bf16[272,256], index: 1, kind: input, shape index: {}]
  %s2 = inlined_call_operand.hbm [shape: f32[8,256], index: 2, kind: input, shape index: {}]
  %s3 = inlined_call_operand.hbm [shape: f32[8,256], index: 3, kind: output, shape index: {}]
  %s4 = sld [smem:[#allocation0]]
  $region34: #{tpu_custom_call.1} parent=0
    _
  %s6 = ssub.s32 1, %s4
  %s7 = scalar_select 0, %s6, %s4
  $region1: #{tpu_custom_call.1} parent=0
    #allocation2 [shape = 'u8[4096]{0}', space=vmem, size = 0x1000, scoped, tag = 'input window, operand 0, single buffered']
    #allocation3 [shape = 's32[1]{0}', space=sflag, size = 0x4, scoped, tag = 'scoped memory for tpu_custom_call.1']
    #allocation4 [shape = 's32[1]{0}', space=sflag, size = 0x4, scoped, tag = 'scoped memory for tpu_custom_call.1']
    #allocation5 [shape = 'u8[139264]{0}', space=vmem, size = 0x22000, scoped, tag = 'input window, operand 1, single buffered']
    #allocation6 [shape = 's32[1]{0}', space=sflag, size = 0x4, scoped, tag = 'scoped memory for tpu_custom_call.1']
    #allocation7 [shape = 'u8[8192]{0}', space=vmem, size = 0x2000, scoped, tag = 'input window, operand 2, single buffered']
    #allocation8 [shape = 'u8[8192]{0}', space=vmem, size = 0x2000, scoped, tag = 'output window, operand 0, single buffered']
    %8 = vsyncpa [#allocation3], 0
    %9 = vsyncpa [#allocation6], 0
    %10 = vsyncpa [#allocation4], 0
    // Predicated region
    $region2: #{tpu_custom_call.1} parent=1 // pred_check
      _
    $region3: #{tpu_custom_call.1} parent=1 // pred_check_branch
      %12 = sbr.rel (0) target = $region5
    $region4: #{tpu_custom_call.1} parent=1 // pred_region
      %s14 = ssub.s32 128, 128
      %15 = vsyncadd [#allocation3], %s14
      %s17 = sshll.u32 [#allocation2], 4
      %s18 = int_to_ptr.vmem [resolvable:$true] %s17
      %20 = dma.hbm_to_vmem [thread:$0]  %s0, 128, %s18, [#allocation3]
    $region5: #{tpu_custom_call.1} parent=1 // pred_fallthru
      _
    // Predicated region
    $region6: #{tpu_custom_call.1} parent=1 // pred_check
      _
    $region7: #{tpu_custom_call.1} parent=1 // pred_check_branch
      %22 = sbr.rel (0) target = $region9
    $region8: #{tpu_custom_call.1} parent=1 // pred_region
      %s24 = ssub.s32 4352, 4352
      %25 = vsyncadd [#allocation6], %s24
      %s26 = sshll.u32 [#allocation5], 4
      %s27 = int_to_ptr.vmem [resolvable:$true] %s26
      %32 = dma.hbm_to_vmem [thread:$0]  %s1, 4352, %s27, [#allocation6], 128, 128, 8
    $region9: #{tpu_custom_call.1} parent=1 // pred_fallthru
      _
    // Predicated region
    $region10: #{tpu_custom_call.1} parent=1 // pred_check
      _
    $region11: #{tpu_custom_call.1} parent=1 // pred_check_branch
      %34 = sbr.rel (0) target = $region13
    $region12: #{tpu_custom_call.1} parent=1 // pred_region
      %s36 = ssub.s32 256, 256
      %37 = vsyncadd [#allocation6], %s36
      %s39 = sshll.u32 [#allocation7], 4
      %s40 = int_to_ptr.vmem [resolvable:$true] %s39
      %42 = dma.hbm_to_vmem [thread:$0]  %s2, 256, %s40, [#allocation6]
    $region13: #{tpu_custom_call.1} parent=1 // pred_fallthru
      _
    // Predicated region
    $region14: #{tpu_custom_call.1} parent=1 // pred_check
      _
    $region15: #{tpu_custom_call.1} parent=1 // pred_check_branch
      %44 = sbr.rel (0) target = $region17
    $region16: #{tpu_custom_call.1} parent=1 // pred_region
      %45 = dma.done [#allocation3], 128
    $region17: #{tpu_custom_call.1} parent=1 // pred_fallthru
      _
    // Predicated region
    $region18: #{tpu_custom_call.1} parent=1 // pred_check
      _
    $region19: #{tpu_custom_call.1} parent=1 // pred_check_branch
      %47 = sbr.rel (0) target = $region21
    $region20: #{tpu_custom_call.1} parent=1 // pred_region
      %48 = dma.done [#allocation6], 4352
    $region21: #{tpu_custom_call.1} parent=1 // pred_fallthru
      _
    // Predicated region
    $region22: #{tpu_custom_call.1} parent=1 // pred_check
      _
    $region23: #{tpu_custom_call.1} parent=1 // pred_check_branch
      %50 = sbr.rel (0) target = $region25
    $region24: #{tpu_custom_call.1} parent=1 // pred_region
      %51 = dma.done [#allocation6], 256
    $region25: #{tpu_custom_call.1} parent=1 // pred_fallthru
      _
    %v53 = vld [vmem:[#allocation2] sm:$0xff]
    %v54 = vpack.c.bf16 %v53, %v53
    %v55 = vld [vmem:[#allocation5] sm:$0xf]
    %v56 = vld [vmem:[#allocation5 + $0x8] sm:$0xf]
    %v57 = vld [vmem:[#allocation5 + $0x10] sm:$0xf]
    %v58 = vld [vmem:[#allocation5 + $0x18] sm:$0xf]
    %v59 = vld [vmem:[#allocation5 + $0x20] sm:$0xf]
    %v60 = vld [vmem:[#allocation5 + $0x28] sm:$0xf]
    %v61 = vld [vmem:[#allocation5 + $0x30] sm:$0xf]
    %v62 = vld [vmem:[#allocation5 + $0x38] sm:$0xf]
    %v63 = vld [vmem:[#allocation5 + $0x40] sm:$0xf]
    %v64 = vld [vmem:[#allocation5 + $0x48] sm:$0xf]
    %v65 = vld [vmem:[#allocation5 + $0x50] sm:$0xf]
    %v66 = vld [vmem:[#allocation5 + $0x58] sm:$0xf]
    %v67 = vld [vmem:[#allocation5 + $0x60] sm:$0xf]
    %v68 = vld [vmem:[#allocation5 + $0x68] sm:$0xf]
    %v69 = vld [vmem:[#allocation5 + $0x70] sm:$0xf]
    %v70 = vld [vmem:[#allocation5 + $0x78] sm:$0xf]
    %v71 = vld [vmem:[#allocation5 + $0x80] sm:$0xf]
    %v72 = vld [vmem:[#allocation5 + $0x88] sm:$0xf]
    %v73 = vld [vmem:[#allocation5 + $0x90] sm:$0xff]
    %v74 = vld [vmem:[#allocation5 + $0x98] sm:$0xff]
    %v75 = vld [vmem:[#allocation5 + $0xa0] sm:$0xff]
    %v76 = vld [vmem:[#allocation5 + $0xa8] sm:$0xff]
    %v77 = vld [vmem:[#allocation5 + $0xb0] sm:$0xff]
    %v78 = vld [vmem:[#allocation5 + $0xb8] sm:$0xff]
    %v79 = vld [vmem:[#allocation5 + $0xc0] sm:$0xff]
    %v80 = vld [vmem:[#allocation5 + $0xc8] sm:$0xff]
    %v81 = vld [vmem:[#allocation5 + $0xd0] sm:$0xff]
    %v82 = vld [vmem:[#allocation5 + $0xd8] sm:$0xff]
    %v83 = vld [vmem:[#allocation5 + $0xe0] sm:$0xff]
    %v84 = vld [vmem:[#allocation5 + $0xe8] sm:$0xff]
    %v85 = vld [vmem:[#allocation5 + $0xf0] sm:$0xff]
    %v86 = vld [vmem:[#allocation5 + $0xf8] sm:$0xff]
    %v87 = vld [vmem:[#allocation5 + $0x100] sm:$0xff]
    %v88 = vld [vmem:[#allocation5 + $0x108] sm:$0xff]
    %v89 = vld [vmem:[#allocation7] ss:$0 sm:$0xff]
    %v90 = vld [vmem:[#allocation7 + $0x1] ss:$0 sm:$0xff]
    %s91 = scalar_lea.vmem [#allocation7], 2
    %v92 = vld [vmem:[%s91] ss:$8 sm:$0x3]
    %v95 = vunpack.c.l.b16 %v55
    %v96 = vunpack.c.l.b16 %v56
    %v97 = vpack.c.b16 %v96, %v95
    %vm99 = vcmask 130048
    %v101 = vsel %vm99, %v54, 0
    %103 = vmatprep.subr.bf16.mxu0 0
    %104 = vmatpush1.bf16.msra.mxu0 %v97
    %105 = vmatprep.subr.bf16.mxu0 0
    %106 = vmatpush1.bf16.msra.mxu0 0
    %107 = vmatprep.subr.bf16.mxu0 0
    %108 = vmatpush1.bf16.msra.mxu0 0
    %109 = vmatprep.subr.bf16.mxu0 0
    %110 = vmatpush1.bf16.msra.mxu0 0
    %111 = vmatprep.subr.bf16.mxu0 0
    %112 = vmatpush1.bf16.msra.mxu0 0
    %113 = vmatprep.subr.bf16.mxu0 0
    %114 = vmatpush1.bf16.msra.mxu0 0
    %115 = vmatprep.subr.bf16.mxu0 0
    %116 = vmatpush1.bf16.msra.mxu0 0
    %117 = vmatprep.subr.bf16.mxu0 0
    %118 = vmatpush1.bf16.msra.mxu0 0
    %119 = vmatprep.subr.bf16.mxu0 0
    %120 = vmatpush1.bf16.msra.mxu0 0
    %121 = vmatprep.subr.bf16.mxu0 0
    %122 = vmatpush1.bf16.msra.mxu0 0
    %123 = vmatprep.subr.bf16.mxu0 0
    %124 = vmatpush1.bf16.msra.mxu0 0
    %125 = vmatprep.subr.bf16.mxu0 0
    %126 = vmatpush1.bf16.msra.mxu0 0
    %127 = vmatprep.subr.bf16.mxu0 0
    %128 = vmatpush1.bf16.msra.mxu0 0
    %129 = vmatprep.subr.bf16.mxu0 0
    %130 = vmatpush1.bf16.msra.mxu0 0
    %131 = vmatprep.subr.bf16.mxu0 0
    %132 = vmatpush1.bf16.msra.mxu0 0
    %133 = vmatprep.subr.bf16.mxu0 0
    %134 = vmatpush1.bf16.msra.mxu0 0
    %135 = vmatprep.mubr.bf16.mxu0 0
    %136 = vmatmul.mubr.bf16.gmra.mrb[0].mxu0 %v101
    %v137 = vpop.f32.mrb[0].mxu0
    %v138 = vadd.f32 %v89, %v137
    %v139 = vpop.f32.mrb[0].mxu0
    %v140 = vpop.f32.mrb[0].mxu0
    %v141 = vpop.f32.mrb[0].mxu0
    %142 = vdwg.mxu0
    %v143 = vmax.f32 %v138, 0.0
    %v144 = vpack.c.bf16 %v143, %v143
    %v161 = vunpack.c.l.b16 %v57
    %v162 = vunpack.c.l.b16 %v58
    %v163 = vunpack.c.l.b16 %v59
    %v164 = vunpack.c.l.b16 %v60
    %v165 = vunpack.c.l.b16 %v61
    %v166 = vunpack.c.l.b16 %v62
    %v167 = vunpack.c.l.b16 %v63
    %v168 = vunpack.c.l.b16 %v64
    %v169 = vunpack.c.l.b16 %v65
    %v170 = vunpack.c.l.b16 %v66
    %v171 = vunpack.c.l.b16 %v67
    %v172 = vunpack.c.l.b16 %v68
    %v173 = vunpack.c.l.b16 %v69
    %v174 = vunpack.c.l.b16 %v70
    %v175 = vunpack.c.l.b16 %v71
    %v176 = vunpack.c.l.b16 %v72
    %v177 = vpack.c.b16 %v162, %v161
    %v178 = vpack.c.b16 %v164, %v163
    %v179 = vpack.c.b16 %v166, %v165
    %v180 = vpack.c.b16 %v168, %v167
    %v181 = vpack.c.b16 %v170, %v169
    %v182 = vpack.c.b16 %v172, %v171
    %v183 = vpack.c.b16 %v174, %v173
    %v184 = vpack.c.b16 %v176, %v175
    %193 = vmatprep.subr.bf16.mxu0 0
    %194 = vmatpush1.bf16.msra.mxu0 %v177
    %195 = vmatprep.subr.bf16.mxu0 0
    %196 = vmatpush1.bf16.msra.mxu0 %v178
    %197 = vmatprep.subr.bf16.mxu0 0
    %198 = vmatpush1.bf16.msra.mxu0 %v179
    %199 = vmatprep.subr.bf16.mxu0 0
    %200 = vmatpush1.bf16.msra.mxu0 %v180
    %201 = vmatprep.subr.bf16.mxu0 0
    %202 = vmatpush1.bf16.msra.mxu0 %v181
    %203 = vmatprep.subr.bf16.mxu0 0
    %204 = vmatpush1.bf16.msra.mxu0 %v182
    %205 = vmatprep.subr.bf16.mxu0 0
    %206 = vmatpush1.bf16.msra.mxu0 %v183
    %207 = vmatprep.subr.bf16.mxu0 0
    %208 = vmatpush1.bf16.msra.mxu0 %v184
    %209 = vmatprep.subr.bf16.mxu0 0
    %210 = vmatpush1.bf16.msra.mxu0 0
    %211 = vmatprep.subr.bf16.mxu0 0
    %212 = vmatpush1.bf16.msra.mxu0 0
    %213 = vmatprep.subr.bf16.mxu0 0
    %214 = vmatpush1.bf16.msra.mxu0 0
    %215 = vmatprep.subr.bf16.mxu0 0
    %216 = vmatpush1.bf16.msra.mxu0 0
    %217 = vmatprep.subr.bf16.mxu0 0
    %218 = vmatpush1.bf16.msra.mxu0 0
    %219 = vmatprep.subr.bf16.mxu0 0
    %220 = vmatpush1.bf16.msra.mxu0 0
    %221 = vmatprep.subr.bf16.mxu0 0
    %222 = vmatpush1.bf16.msra.mxu0 0
    %223 = vmatprep.subr.bf16.mxu0 0
    %224 = vmatpush1.bf16.msra.mxu0 0
    %225 = vmatprep.mubr.bf16.mxu0 0
    %226 = vmatmul.mubr.bf16.gmra.mrb[0].mxu0 %v144
    %v227 = vpop.f32.mrb[0].mxu0
    %v228 = vadd.f32 %v90, %v227
    %v229 = vpop.f32.mrb[0].mxu0
    %v230 = vpop.f32.mrb[0].mxu0
    %v231 = vpop.f32.mrb[0].mxu0
    %232 = vdwg.mxu0
    %v233 = vmax.f32 %v228, 0.0
    %v234 = vpack.c.bf16 %v233, %v233
    %v236 = vlaneseq
    %v237 = vshrl.u32 %v236, 7
    %v238 = vsub.s32 0, %v237
    %v239 = vrot.slane %v92, %v238
    %v240 = vlaneseq
    %v241 = vshrl.u32 %v240, 7
    %v242 = vsub.s32 1, %v241
    %v243 = vrot.slane %v92, %v242
    %v262 = vunpack.c.l.b16 %v73
    %v263 = vunpack.c.h.b16 %v73
    %v264 = vunpack.c.l.b16 %v74
    %v265 = vunpack.c.h.b16 %v74
    %v266 = vunpack.c.l.b16 %v75
    %v267 = vunpack.c.h.b16 %v75
    %v268 = vunpack.c.l.b16 %v76
    %v269 = vunpack.c.h.b16 %v76
    %v270 = vunpack.c.l.b16 %v77
    %v271 = vunpack.c.h.b16 %v77
    %v272 = vunpack.c.l.b16 %v78
    %v273 = vunpack.c.h.b16 %v78
    %v274 = vunpack.c.l.b16 %v79
    %v275 = vunpack.c.h.b16 %v79
    %v276 = vunpack.c.l.b16 %v80
    %v277 = vunpack.c.h.b16 %v80
    %v278 = vunpack.c.l.b16 %v81
    %v279 = vunpack.c.h.b16 %v81
    %v280 = vunpack.c.l.b16 %v82
    %v281 = vunpack.c.h.b16 %v82
    %v282 = vunpack.c.l.b16 %v83
    %v283 = vunpack.c.h.b16 %v83
    %v284 = vunpack.c.l.b16 %v84
    %v285 = vunpack.c.h.b16 %v84
    %v286 = vunpack.c.l.b16 %v85
    %v287 = vunpack.c.h.b16 %v85
    %v288 = vunpack.c.l.b16 %v86
    %v289 = vunpack.c.h.b16 %v86
    %v290 = vunpack.c.l.b16 %v87
    %v291 = vunpack.c.h.b16 %v87
    %v292 = vunpack.c.l.b16 %v88
    %v293 = vunpack.c.h.b16 %v88
    %v294 = vpack.c.b16 %v264, %v262
    %v295 = vpack.c.b16 %v265, %v263
    %v296 = vpack.c.b16 %v268, %v266
    %v297 = vpack.c.b16 %v269, %v267
    %v298 = vpack.c.b16 %v272, %v270
    %v299 = vpack.c.b16 %v273, %v271
    %v300 = vpack.c.b16 %v276, %v274
    %v301 = vpack.c.b16 %v277, %v275
    %v302 = vpack.c.b16 %v280, %v278
    %v303 = vpack.c.b16 %v281, %v279
    %v304 = vpack.c.b16 %v284, %v282
    %v305 = vpack.c.b16 %v285, %v283
    %v306 = vpack.c.b16 %v288, %v286
    %v307 = vpack.c.b16 %v289, %v287
    %v308 = vpack.c.b16 %v292, %v290
    %v309 = vpack.c.b16 %v293, %v291
    %326 = vmatprep.subr.bf16.mxu0 %v295
    %327 = vmatpush1.bf16.msra.mxu0 %v294
    %328 = vmatprep.subr.bf16.mxu0 %v297
    %329 = vmatpush1.bf16.msra.mxu0 %v296
    %330 = vmatprep.subr.bf16.mxu0 %v299
    %331 = vmatpush1.bf16.msra.mxu0 %v298
    %332 = vmatprep.subr.bf16.mxu0 %v301
    %333 = vmatpush1.bf16.msra.mxu0 %v300
    %334 = vmatprep.subr.bf16.mxu0 %v303
    %335 = vmatpush1.bf16.msra.mxu0 %v302
    %336 = vmatprep.subr.bf16.mxu0 %v305
    %337 = vmatpush1.bf16.msra.mxu0 %v304
    %338 = vmatprep.subr.bf16.mxu0 %v307
    %339 = vmatpush1.bf16.msra.mxu0 %v306
    %340 = vmatprep.subr.bf16.mxu0 %v309
    %341 = vmatpush1.bf16.msra.mxu0 %v308
    %342 = vmatprep.subr.bf16.mxu0 0
    %343 = vmatpush1.bf16.msra.mxu0 0
    %344 = vmatprep.subr.bf16.mxu0 0
    %345 = vmatpush1.bf16.msra.mxu0 0
    %346 = vmatprep.subr.bf16.mxu0 0
    %347 = vmatpush1.bf16.msra.mxu0 0
    %348 = vmatprep.subr.bf16.mxu0 0
    %349 = vmatpush1.bf16.msra.mxu0 0
    %350 = vmatprep.subr.bf16.mxu0 0
    %351 = vmatpush1.bf16.msra.mxu0 0
    %352 = vmatprep.subr.bf16.mxu0 0
    %353 = vmatpush1.bf16.msra.mxu0 0
    %354 = vmatprep.subr.bf16.mxu0 0
    %355 = vmatpush1.bf16.msra.mxu0 0
    %356 = vmatprep.subr.bf16.mxu0 0
    %357 = vmatpush1.bf16.msra.mxu0 0
    %358 = vmatprep.mubr.bf16.mxu0 0
    %359 = vmatmul.mubr.bf16.gmra.mrb[0].mxu0 %v234
    %v360 = vpop.f32.mrb[0].mxu0
    %v361 = vadd.f32 %v239, %v360
    %v362 = vpop.f32.mrb[0].mxu0
    %v363 = vadd.f32 %v243, %v362
    %v364 = vpop.f32.mrb[0].mxu0
    %v365 = vpop.f32.mrb[0].mxu0
    %366 = vdwg.mxu0
    %v367 = vmax.f32 %v363, -20.0
    %v368 = vmin.f32 %v367, 2.0
    %v369 = vmul.f32 %v368, 1.442695
    %v370 = vpow.pop %v369
    %371 = vst [vmem:[#allocation8] sm:$0xff] %v361
    %372 = vst [vmem:[#allocation8 + $0x8] sm:$0xff] %v370
    // Predicated region
    $region26: #{tpu_custom_call.1} parent=1 // pred_check
      _
    $region27: #{tpu_custom_call.1} parent=1 // pred_check_branch
      %374 = sbr.rel (0) target = $region29
    $region28: #{tpu_custom_call.1} parent=1 // pred_region
      %s376 = ssub.s32 256, 256
      %377 = vsyncadd [#allocation4], %s376
      %s379 = sshll.u32 [#allocation8], 4
      %s380 = int_to_ptr.vmem [resolvable:$true] %s379
      %382 = dma.vmem_to_hbm [thread:$0]  %s380, 256, %s3, [#allocation4]
    $region29: #{tpu_custom_call.1} parent=1 // pred_fallthru
      _
    // Predicated region
    $region30: #{tpu_custom_call.1} parent=1 // pred_check
      _
    $region31: #{tpu_custom_call.1} parent=1 // pred_check_branch
      %384 = sbr.rel (0) target = $region33
    $region32: #{tpu_custom_call.1} parent=1 // pred_region
      %385 = dma.done [#allocation4], 256
    $region33: #{tpu_custom_call.1} parent=1 // pred_fallthru
      _
    %386 = vsyncpa [#allocation3], 1
    %387 = vsyncpa [#allocation6], 1
    %388 = vsyncpa [#allocation4], 1

</llo_original>
